<compile_context>
chip_gen: v5e
topology: v5e:2x2
jax: 0.10.0
libtpu: 0.0.40
codegen_flags: <defaults>
</compile_context>

<pallas_src>
import jax
import jax.numpy as jnp
from jax import lax
from jax.experimental import pallas as pl
from jax.experimental.pallas import tpu as pltpu


def multiattention_kernel(x_ref, xcol_ref, w_ref, wkcol_ref, o_ref):
    """TB batch rows, all heads.

    x_ref     : (TB, 1, G)   rows of x
    xcol_ref  : (TB, G, 1)   same rows as columns
    w_ref     : (4, H, G)    stacked rows: [WQ, WK, WQ*WK, WV*W0]
    wkcol_ref : (H, G, 1)    WK in its native column layout
    o_ref     : (TB, 1, G)   output rows
    """
    TB = x_ref.shape[0]
    H = wkcol_ref.shape[0]
    G = x_ref.shape[-1]

    # Hoisted above the row loop: whole weight stack is only a few vregs.
    w = w_ref[...]                              # (4, H, G)
    wq, wk, wqk, wvw0 = w[0], w[1], w[2], w[3]
    ones_row = jnp.ones((1, G), jnp.float32)

    def row_body(r, carry):
        xb = x_ref[r]                           # (1, G)
        xcol = xcol_ref[r]                      # (G, 1)
        xb2 = xb * xb

        q_all = xb * wq                         # (H, G)  q rows, all heads
        k_all = xb * wk                         # (H, G)  k rows, all heads
        d_all = xb2 * wqk                       # (H, G)  diagonal scores q[i]*k[i]
        v_all = xb * wvw0                       # (H, G)  v rows (pre-scaled by W0)

        # Exact per-row softmax max, vectorised over heads:
        #   max_j q[i]*k[j] == max(q[i]*kmax, q[i]*kmin)
        kmax = jnp.max(k_all, axis=1, keepdims=True)        # (H, 1)
        kmin = jnp.min(k_all, axis=1, keepdims=True)        # (H, 1)
        m_all = jnp.maximum(q_all * kmax, q_all * kmin)     # (H, G)
        # unnormalised diagonal element e[i,i] = exp(q[i]*k[i] - m[i])
        diag_all = jnp.exp(d_all - m_all)                   # (H, G)

        acc = jnp.zeros((1, G), jnp.float32)
        # H is tiny -> static unroll.
        # TODO(synk): if a bundle dump shows vreg spills for larger H/G, switch
        # this to lax.fori_loop with dynamic head indexing to bound live ranges.
        for h in range(H):
            q = q_all[h:h + 1, :]                           # (1, G)
            v = v_all[h:h + 1, :]                           # (1, G)
            k_col = xcol * wkcol_ref[h]                     # (G, 1)

            # transposed scores: sT[j, i] = k[j] * q[i] == S[i, j]
            sT = k_col * q                                  # (G, G)
            e = jnp.exp(sT - m_all[h:h + 1, :])             # (G, G) unnormalised

            # One lane-dense MXU matmul gives both the weighted sum and the
            # softmax denominator:  [v; 1] @ e  ->  [head_raw; denom]
            lhs = jnp.concatenate([v, ones_row], axis=0)    # (2, G)
            res = jnp.dot(lhs, e, preferred_element_type=jnp.float32)  # (2, G)
            head_raw = res[0:1, :]
            denom = res[1:2, :]

            # mask diag after softmax (no renorm) == subtract diag term, then
            # normalise by the FULL row sum
            num = head_raw - diag_all[h:h + 1, :] * v
            acc = acc + num * pl.reciprocal(denom, approx=True)

        o_ref[r] = acc                                      # (1, G) row store
        return carry

    lax.fori_loop(0, TB, row_body, 0)


def multiattention_forward(x, WQ, WK, WV, W0, *, block_b=8):
    """x: (B, G) f32; WQ/WK/WV: (H, G, 1) f32 (PyTorch layout); W0: (H,) f32."""
    B, G = x.shape
    H = WQ.shape[0]

    wq = WQ.reshape(H, G)
    wk = WK.reshape(H, G)
    wv = WV.reshape(H, G)
    # Fold the scalar head-mixing weight into WV (head output is linear in v),
    # keep WK rows for the kmax/kmin trick, precompute WQ*WK for the diagonal.
    w_rows = jnp.stack([wq, wk, wq * wk, wv * W0[:, None]], axis=0)   # (4, H, G)

    # Batch blocking: TB rows per grid step (pad B up to a multiple of TB).
    TB = max(1, min(block_b, B))
    pad = (-B) % TB
    if pad:
        x = jnp.concatenate([x, jnp.zeros((pad, G), x.dtype)], axis=0)
    Bp = B + pad

    x_row = x.reshape(Bp, 1, G)
    x_col = x.reshape(Bp, G, 1)

    grid_spec = pltpu.PrefetchScalarGridSpec(
        num_scalar_prefetch=0,
        grid=(Bp // TB,),
        in_specs=[
            pl.BlockSpec((TB, 1, G), lambda b: (b, 0, 0)),   # x rows
            pl.BlockSpec((TB, G, 1), lambda b: (b, 0, 0)),   # x columns
            pl.BlockSpec((4, H, G), lambda b: (0, 0, 0)),    # stacked row weights
            pl.BlockSpec((H, G, 1), lambda b: (0, 0, 0)),    # WK columns
        ],
        out_specs=pl.BlockSpec((TB, 1, G), lambda b: (b, 0, 0)),
    )

    cost = pl.CostEstimate(
        flops=int(5 * Bp * H * G * G),
        transcendentals=int(Bp * H * G * (G + 1)),
        bytes_accessed=int(4 * (3 * Bp * G + 5 * H * G)),
    )

    out = pl.pallas_call(
        multiattention_kernel,
        out_shape=jax.ShapeDtypeStruct((Bp, 1, G), jnp.float32),
        grid_spec=grid_spec,
        compiler_params=pltpu.CompilerParams(
            dimension_semantics=("parallel",)),              # batch blocks independent
        cost_estimate=cost,
    )(x_row, x_col, w_rows, WK)
    return out.reshape(Bp, G)[:B]


def reference(x, WQ, WK, WV, W0):
    """Pure-JAX transcription of the PyTorch forward (mode=0)."""
    G = x.shape[1]
    H = WQ.shape[0]
    outs = []
    for h in range(H):
        q = x * WQ[h, :, 0]                                # (B, G)
        k = x * WK[h, :, 0]
        v = x * WV[h, :, 0]
        s = q[:, :, None] * k[:, None, :]                  # (B, G, G)
        z = jax.nn.softmax(s, axis=2)
        z = z * (1.0 - jnp.eye(G, dtype=x.dtype))          # mask diag after softmax
        outs.append(jnp.einsum("bij,bj->bi", z, v))        # (B, G)
    out_seq = jnp.stack(outs, axis=-1)                     # (B, G, H)
    return jnp.einsum("bgh,h->bg", out_seq, W0)


if __name__ == "__main__":
    # small shapes consistent with the module: n_gene == n_feature, per-head
    # (F, 1) projection vectors, scalar head-mixing weights.  B=16 with TB=8
    # gives a 2-step "parallel" grid (keeps both v7x TensorCores busy).
    B, H, G = 16, 4, 128

    key = jax.random.PRNGKey(0)
    kx, kq, kk, kv = jax.random.split(key, 4)

    # deterministic xavier_normal-style init (fan_in=G, fan_out=H, gain=1)
    std = (2.0 / (G + H)) ** 0.5
    WQ = std * jax.random.normal(kq, (H, G, 1), jnp.float32)
    WK = std * jax.random.normal(kk, (H, G, 1), jnp.float32)
    WV = std * jax.random.normal(kv, (H, G, 1), jnp.float32)
    W0 = jnp.full((H,), 0.001, jnp.float32)

    x = jax.random.normal(kx, (B, G), jnp.float32)

    out = multiattention_forward(x, WQ, WK, WV, W0, block_b=8)
    out = jax.block_until_ready(out)

    ref = reference(x, WQ, WK, WV, W0)
    assert out.shape == (B, G), out.shape
    max_err = float(jnp.max(jnp.abs(out - ref)))
    assert jnp.allclose(out, ref, atol=3e-5, rtol=1e-3), max_err

    print("KERNEL_OK")
</pallas_src>

<mosaic_0001>
module attributes {stable_mosaic.version = 11 : i64} {
  func.func @multiattention_kernel(%arg0: i32, %arg1: memref<8x1x128xf32, #tpu.memory_space<vmem>>, %arg2: memref<8x128x1xf32, #tpu.memory_space<vmem>>, %arg3: memref<4x4x128xf32, #tpu.memory_space<vmem>>, %arg4: memref<4x128x1xf32, #tpu.memory_space<vmem>>, %arg5: memref<8x1x128xf32, #tpu.memory_space<vmem>>) attributes {dimension_semantics = [#tpu.dimension_semantics<parallel>], iteration_bounds = array<i64: 2>, scalar_prefetch = 0 : i64, scratch_operands = 0 : i64, tpu.core_type = #tpu.core_type<tc>, window_params = [{transform_indices = @transform_0, window_bounds = array<i64: 8, 1, 128>}, {transform_indices = @transform_1, window_bounds = array<i64: 8, 128, 1>}, {pipeline_mode = #tpu.pipeline_mode<synchronous>, transform_indices = @transform_2, window_bounds = array<i64: 4, 4, 128>}, {pipeline_mode = #tpu.pipeline_mode<synchronous>, transform_indices = @transform_3, window_bounds = array<i64: 4, 128, 1>}, {transform_indices = @transform_4, window_bounds = array<i64: 8, 1, 128>}]} {
    %c0 = arith.constant 0 : index
    %c0_0 = arith.constant 0 : index
    %c0_1 = arith.constant 0 : index
    %0 = vector.load %arg3[%c0, %c0_0, %c0_1] : memref<4x4x128xf32, #tpu.memory_space<vmem>>, vector<4x4x128xf32>
    %1 = vector.extract_strided_slice %0 {offsets = [0, 0, 0], sizes = [1, 4, 128], strides = [1, 1, 1]} : vector<4x4x128xf32> to vector<1x4x128xf32>
    %2 = vector.shape_cast %1 : vector<1x4x128xf32> to vector<4x128xf32>
    %3 = vector.extract_strided_slice %0 {offsets = [1, 0, 0], sizes = [1, 4, 128], strides = [1, 1, 1]} : vector<4x4x128xf32> to vector<1x4x128xf32>
    %4 = vector.shape_cast %3 : vector<1x4x128xf32> to vector<4x128xf32>
    %5 = vector.extract_strided_slice %0 {offsets = [2, 0, 0], sizes = [1, 4, 128], strides = [1, 1, 1]} : vector<4x4x128xf32> to vector<1x4x128xf32>
    %6 = vector.shape_cast %5 : vector<1x4x128xf32> to vector<4x128xf32>
    %7 = vector.extract_strided_slice %0 {offsets = [3, 0, 0], sizes = [1, 4, 128], strides = [1, 1, 1]} : vector<4x4x128xf32> to vector<1x4x128xf32>
    %8 = vector.shape_cast %7 : vector<1x4x128xf32> to vector<4x128xf32>
    %cst = arith.constant 1.000000e+00 : f32
    %9 = vector.broadcast %cst : f32 to vector<1x128xf32>
    %c0_i32 = arith.constant 0 : i32
    %c8_i32 = arith.constant 8 : i32
    %10 = arith.addi %c0_i32, %c8_i32 : i32
    %c1_i32 = arith.constant 1 : i32
    scf.for %arg6 = %c0_i32 to %10 step %c1_i32  : i32 {
      %11 = arith.index_cast %arg6 : i32 to index
      %c0_3 = arith.constant 0 : index
      %c0_4 = arith.constant 0 : index
      %12 = vector.load %arg1[%11, %c0_3, %c0_4] : memref<8x1x128xf32, #tpu.memory_space<vmem>>, vector<1x1x128xf32>
      %13 = vector.shape_cast %12 : vector<1x1x128xf32> to vector<1x128xf32>
      %14 = arith.index_cast %arg6 : i32 to index
      %c0_5 = arith.constant 0 : index
      %c0_6 = arith.constant 0 : index
      %15 = vector.load %arg2[%14, %c0_5, %c0_6] : memref<8x128x1xf32, #tpu.memory_space<vmem>>, vector<1x128x1xf32>
      %16 = vector.shape_cast %15 : vector<1x128x1xf32> to vector<128x1xf32>
      %17 = arith.mulf %13, %13 : vector<1x128xf32>
      %18 = vector.broadcast %13 : vector<1x128xf32> to vector<4x128xf32>
      %19 = arith.mulf %18, %2 : vector<4x128xf32>
      %20 = vector.broadcast %13 : vector<1x128xf32> to vector<4x128xf32>
      %21 = arith.mulf %20, %4 : vector<4x128xf32>
      %22 = vector.broadcast %17 : vector<1x128xf32> to vector<4x128xf32>
      %23 = arith.mulf %22, %6 : vector<4x128xf32>
      %24 = vector.broadcast %13 : vector<1x128xf32> to vector<4x128xf32>
      %25 = arith.mulf %24, %8 : vector<4x128xf32>
      %cst_7 = arith.constant dense<0xFF800000> : vector<4xf32>
      %26 = vector.multi_reduction <maximumf>, %21, %cst_7 [1] : vector<4x128xf32> to vector<4xf32>
      %27 = vector.shape_cast %26 : vector<4xf32> to vector<4x1xf32>
      %cst_8 = arith.constant dense<0x7F800000> : vector<4xf32>
      %28 = vector.multi_reduction <minimumf>, %21, %cst_8 [1] : vector<4x128xf32> to vector<4xf32>
      %29 = vector.shape_cast %28 : vector<4xf32> to vector<4x1xf32>
      %30 = vector.broadcast %27 : vector<4x1xf32> to vector<4x128xf32>
      %31 = arith.mulf %19, %30 : vector<4x128xf32>
      %32 = vector.broadcast %29 : vector<4x1xf32> to vector<4x128xf32>
      %33 = arith.mulf %19, %32 : vector<4x128xf32>
      %34 = arith.maximumf %31, %33 : vector<4x128xf32>
      %35 = arith.subf %23, %34 : vector<4x128xf32>
      %36 = math.exp %35 : vector<4x128xf32>
      %cst_9 = arith.constant 0.000000e+00 : f32
      %37 = vector.broadcast %cst_9 : f32 to vector<1x128xf32>
      %38 = vector.extract_strided_slice %19 {offsets = [0, 0], sizes = [1, 128], strides = [1, 1]} : vector<4x128xf32> to vector<1x128xf32>
      %39 = vector.extract_strided_slice %25 {offsets = [0, 0], sizes = [1, 128], strides = [1, 1]} : vector<4x128xf32> to vector<1x128xf32>
      %c0_10 = arith.constant 0 : index
      %c0_11 = arith.constant 0 : index
      %c0_12 = arith.constant 0 : index
      %40 = vector.load %arg4[%c0_10, %c0_11, %c0_12] : memref<4x128x1xf32, #tpu.memory_space<vmem>>, vector<1x128x1xf32>
      %41 = vector.shape_cast %40 : vector<1x128x1xf32> to vector<128x1xf32>
      %42 = arith.mulf %16, %41 : vector<128x1xf32>
      %43 = vector.broadcast %42 : vector<128x1xf32> to vector<128x128xf32>
      %44 = vector.broadcast %38 : vector<1x128xf32> to vector<128x128xf32>
      %45 = arith.mulf %43, %44 : vector<128x128xf32>
      %46 = vector.extract_strided_slice %34 {offsets = [0, 0], sizes = [1, 128], strides = [1, 1]} : vector<4x128xf32> to vector<1x128xf32>
      %47 = vector.broadcast %46 : vector<1x128xf32> to vector<128x128xf32>
      %48 = arith.subf %45, %47 : vector<128x128xf32>
      %49 = math.exp %48 : vector<128x128xf32>
      %50 = tpu.concatenate %39, %9 in 0 : vector<1x128xf32>, vector<1x128xf32> -> vector<2x128xf32>
      %cst_13 = arith.constant dense<0.000000e+00> : vector<2x128xf32>
      %51 = tpu.matmul %50, %49, %cst_13 {dimension_numbers = #tpu.dot_dimension_numbers<[1], [0], [0], [1], [0, 0, 1, 1], [], []>} : vector<2x128xf32>, vector<128x128xf32>, vector<2x128xf32> -> vector<2x128xf32>
      %52 = vector.extract_strided_slice %51 {offsets = [0, 0], sizes = [1, 128], strides = [1, 1]} : vector<2x128xf32> to vector<1x128xf32>
      %53 = vector.extract_strided_slice %51 {offsets = [1, 0], sizes = [1, 128], strides = [1, 1]} : vector<2x128xf32> to vector<1x128xf32>
      %54 = vector.extract_strided_slice %36 {offsets = [0, 0], sizes = [1, 128], strides = [1, 1]} : vector<4x128xf32> to vector<1x128xf32>
      %55 = arith.mulf %54, %39 : vector<1x128xf32>
      %56 = arith.subf %52, %55 : vector<1x128xf32>
      %57 = tpu.reciprocal %53 {approx = true} : vector<1x128xf32> -> vector<1x128xf32>
      %58 = arith.mulf %56, %57 : vector<1x128xf32>
      %59 = arith.addf %37, %58 : vector<1x128xf32>
      %60 = vector.extract_strided_slice %19 {offsets = [1, 0], sizes = [1, 128], strides = [1, 1]} : vector<4x128xf32> to vector<1x128xf32>
      %61 = vector.extract_strided_slice %25 {offsets = [1, 0], sizes = [1, 128], strides = [1, 1]} : vector<4x128xf32> to vector<1x128xf32>
      %c1 = arith.constant 1 : index
      %c0_14 = arith.constant 0 : index
      %c0_15 = arith.constant 0 : index
      %62 = vector.load %arg4[%c1, %c0_14, %c0_15] : memref<4x128x1xf32, #tpu.memory_space<vmem>>, vector<1x128x1xf32>
      %63 = vector.shape_cast %62 : vector<1x128x1xf32> to vector<128x1xf32>
      %64 = arith.mulf %16, %63 : vector<128x1xf32>
      %65 = vector.broadcast %64 : vector<128x1xf32> to vector<128x128xf32>
      %66 = vector.broadcast %60 : vector<1x128xf32> to vector<128x128xf32>
      %67 = arith.mulf %65, %66 : vector<128x128xf32>
      %68 = vector.extract_strided_slice %34 {offsets = [1, 0], sizes = [1, 128], strides = [1, 1]} : vector<4x128xf32> to vector<1x128xf32>
      %69 = vector.broadcast %68 : vector<1x128xf32> to vector<128x128xf32>
      %70 = arith.subf %67, %69 : vector<128x128xf32>
      %71 = math.exp %70 : vector<128x128xf32>
      %72 = tpu.concatenate %61, %9 in 0 : vector<1x128xf32>, vector<1x128xf32> -> vector<2x128xf32>
      %cst_16 = arith.constant dense<0.000000e+00> : vector<2x128xf32>
      %73 = tpu.matmul %72, %71, %cst_16 {dimension_numbers = #tpu.dot_dimension_numbers<[1], [0], [0], [1], [0, 0, 1, 1], [], []>} : vector<2x128xf32>, vector<128x128xf32>, vector<2x128xf32> -> vector<2x128xf32>
      %74 = vector.extract_strided_slice %73 {offsets = [0, 0], sizes = [1, 128], strides = [1, 1]} : vector<2x128xf32> to vector<1x128xf32>
      %75 = vector.extract_strided_slice %73 {offsets = [1, 0], sizes = [1, 128], strides = [1, 1]} : vector<2x128xf32> to vector<1x128xf32>
      %76 = vector.extract_strided_slice %36 {offsets = [1, 0], sizes = [1, 128], strides = [1, 1]} : vector<4x128xf32> to vector<1x128xf32>
      %77 = arith.mulf %76, %61 : vector<1x128xf32>
      %78 = arith.subf %74, %77 : vector<1x128xf32>
      %79 = tpu.reciprocal %75 {approx = true} : vector<1x128xf32> -> vector<1x128xf32>
      %80 = arith.mulf %78, %79 : vector<1x128xf32>
      %81 = arith.addf %59, %80 : vector<1x128xf32>
      %82 = vector.extract_strided_slice %19 {offsets = [2, 0], sizes = [1, 128], strides = [1, 1]} : vector<4x128xf32> to vector<1x128xf32>
      %83 = vector.extract_strided_slice %25 {offsets = [2, 0], sizes = [1, 128], strides = [1, 1]} : vector<4x128xf32> to vector<1x128xf32>
      %c2 = arith.constant 2 : index
      %c0_17 = arith.constant 0 : index
      %c0_18 = arith.constant 0 : index
      %84 = vector.load %arg4[%c2, %c0_17, %c0_18] : memref<4x128x1xf32, #tpu.memory_space<vmem>>, vector<1x128x1xf32>
      %85 = vector.shape_cast %84 : vector<1x128x1xf32> to vector<128x1xf32>
      %86 = arith.mulf %16, %85 : vector<128x1xf32>
      %87 = vector.broadcast %86 : vector<128x1xf32> to vector<128x128xf32>
      %88 = vector.broadcast %82 : vector<1x128xf32> to vector<128x128xf32>
      %89 = arith.mulf %87, %88 : vector<128x128xf32>
      %90 = vector.extract_strided_slice %34 {offsets = [2, 0], sizes = [1, 128], strides = [1, 1]} : vector<4x128xf32> to vector<1x128xf32>
      %91 = vector.broadcast %90 : vector<1x128xf32> to vector<128x128xf32>
      %92 = arith.subf %89, %91 : vector<128x128xf32>
      %93 = math.exp %92 : vector<128x128xf32>
      %94 = tpu.concatenate %83, %9 in 0 : vector<1x128xf32>, vector<1x128xf32> -> vector<2x128xf32>
      %cst_19 = arith.constant dense<0.000000e+00> : vector<2x128xf32>
      %95 = tpu.matmul %94, %93, %cst_19 {dimension_numbers = #tpu.dot_dimension_numbers<[1], [0], [0], [1], [0, 0, 1, 1], [], []>} : vector<2x128xf32>, vector<128x128xf32>, vector<2x128xf32> -> vector<2x128xf32>
      %96 = vector.extract_strided_slice %95 {offsets = [0, 0], sizes = [1, 128], strides = [1, 1]} : vector<2x128xf32> to vector<1x128xf32>
      %97 = vector.extract_strided_slice %95 {offsets = [1, 0], sizes = [1, 128], strides = [1, 1]} : vector<2x128xf32> to vector<1x128xf32>
      %98 = vector.extract_strided_slice %36 {offsets = [2, 0], sizes = [1, 128], strides = [1, 1]} : vector<4x128xf32> to vector<1x128xf32>
      %99 = arith.mulf %98, %83 : vector<1x128xf32>
      %100 = arith.subf %96, %99 : vector<1x128xf32>
      %101 = tpu.reciprocal %97 {approx = true} : vector<1x128xf32> -> vector<1x128xf32>
      %102 = arith.mulf %100, %101 : vector<1x128xf32>
      %103 = arith.addf %81, %102 : vector<1x128xf32>
      %104 = vector.extract_strided_slice %19 {offsets = [3, 0], sizes = [1, 128], strides = [1, 1]} : vector<4x128xf32> to vector<1x128xf32>
      %105 = vector.extract_strided_slice %25 {offsets = [3, 0], sizes = [1, 128], strides = [1, 1]} : vector<4x128xf32> to vector<1x128xf32>
      %c3 = arith.constant 3 : index
      %c0_20 = arith.constant 0 : index
      %c0_21 = arith.constant 0 : index
      %106 = vector.load %arg4[%c3, %c0_20, %c0_21] : memref<4x128x1xf32, #tpu.memory_space<vmem>>, vector<1x128x1xf32>
      %107 = vector.shape_cast %106 : vector<1x128x1xf32> to vector<128x1xf32>
      %108 = arith.mulf %16, %107 : vector<128x1xf32>
      %109 = vector.broadcast %108 : vector<128x1xf32> to vector<128x128xf32>
      %110 = vector.broadcast %104 : vector<1x128xf32> to vector<128x128xf32>
      %111 = arith.mulf %109, %110 : vector<128x128xf32>
      %112 = vector.extract_strided_slice %34 {offsets = [3, 0], sizes = [1, 128], strides = [1, 1]} : vector<4x128xf32> to vector<1x128xf32>
      %113 = vector.broadcast %112 : vector<1x128xf32> to vector<128x128xf32>
      %114 = arith.subf %111, %113 : vector<128x128xf32>
      %115 = math.exp %114 : vector<128x128xf32>
      %116 = tpu.concatenate %105, %9 in 0 : vector<1x128xf32>, vector<1x128xf32> -> vector<2x128xf32>
      %cst_22 = arith.constant dense<0.000000e+00> : vector<2x128xf32>
      %117 = tpu.matmul %116, %115, %cst_22 {dimension_numbers = #tpu.dot_dimension_numbers<[1], [0], [0], [1], [0, 0, 1, 1], [], []>} : vector<2x128xf32>, vector<128x128xf32>, vector<2x128xf32> -> vector<2x128xf32>
      %118 = vector.extract_strided_slice %117 {offsets = [0, 0], sizes = [1, 128], strides = [1, 1]} : vector<2x128xf32> to vector<1x128xf32>
      %119 = vector.extract_strided_slice %117 {offsets = [1, 0], sizes = [1, 128], strides = [1, 1]} : vector<2x128xf32> to vector<1x128xf32>
      %120 = vector.extract_strided_slice %36 {offsets = [3, 0], sizes = [1, 128], strides = [1, 1]} : vector<4x128xf32> to vector<1x128xf32>
      %121 = arith.mulf %120, %105 : vector<1x128xf32>
      %122 = arith.subf %118, %121 : vector<1x128xf32>
      %123 = tpu.reciprocal %119 {approx = true} : vector<1x128xf32> -> vector<1x128xf32>
      %124 = arith.mulf %122, %123 : vector<1x128xf32>
      %125 = arith.addf %103, %124 : vector<1x128xf32>
      %126 = arith.index_cast %arg6 : i32 to index
      %c0_23 = arith.constant 0 : index
      %c0_24 = arith.constant 0 : index
      %127 = vector.load %arg5[%126, %c0_23, %c0_24] : memref<8x1x128xf32, #tpu.memory_space<vmem>>, vector<1x1x128xf32>
      %128 = vector.shape_cast %127 : vector<1x1x128xf32> to vector<1x128xf32>
      %129 = vector.shape_cast %125 : vector<1x128xf32> to vector<1x1x128xf32>
      tpu.vector_store %arg5[%126, %c0_23, %c0_24], %129 {strides = array<i32>} : memref<8x1x128xf32, #tpu.memory_space<vmem>>, vector<1x1x128xf32>,
    }
    %c8_i32_2 = arith.constant 8 : i32
    return
  }
  func.func @transform_0(%arg0: i32) -> (i32, i32, i32) {
    %c0_i32 = arith.constant 0 : i32
    %c0_i32_0 = arith.constant 0 : i32
    %c0_i32_1 = arith.constant 0 : i32
    return %arg0, %c0_i32, %c0_i32_0 : i32, i32, i32
  }
  func.func @transform_1(%arg0: i32) -> (i32, i32, i32) {
    %c0_i32 = arith.constant 0 : i32
    %c0_i32_0 = arith.constant 0 : i32
    %c0_i32_1 = arith.constant 0 : i32
    return %arg0, %c0_i32, %c0_i32_0 : i32, i32, i32
  }
  func.func @transform_2(%arg0: i32) -> (i32, i32, i32) {
    %c0_i32 = arith.constant 0 : i32
    %c0_i32_0 = arith.constant 0 : i32
    %c0_i32_1 = arith.constant 0 : i32
    %c0_i32_2 = arith.constant 0 : i32
    return %c0_i32, %c0_i32_0, %c0_i32_1 : i32, i32, i32
  }
  func.func @transform_3(%arg0: i32) -> (i32, i32, i32) {
    %c0_i32 = arith.constant 0 : i32
    %c0_i32_0 = arith.constant 0 : i32
    %c0_i32_1 = arith.constant 0 : i32
    %c0_i32_2 = arith.constant 0 : i32
    return %c0_i32, %c0_i32_0, %c0_i32_1 : i32, i32, i32
  }
  func.func @transform_4(%arg0: i32) -> (i32, i32, i32) {
    %c0_i32 = arith.constant 0 : i32
    %c0_i32_0 = arith.constant 0 : i32
    %c0_i32_1 = arith.constant 0 : i32
    return %arg0, %c0_i32, %c0_i32_0 : i32, i32, i32
  }
}

</mosaic_0001>

<llo_original>
// kernel: tpu_custom_call.1
$region0: #{tpu_custom_call.1}
  #allocation0 [shape = 'u32[]', space=smem, size = 0x4, offset = 0x4, fixed_abs, tag = 'smem constant byte address 0x4 - core index']
  #allocation1 [shape = 'u32[72,128]{1,0:T(1,128)}', space=vmem, size = 0x9000, scoped, tag = 'internal scratch']
  %s0 = inlined_call_operand.vmem [shape: f32[16,1,128], index: 0, kind: input, shape index: {}]
  %s1 = inlined_call_operand.vmem [shape: f32[16,128,1], index: 1, kind: input, shape index: {}]
  %s2 = inlined_call_operand.vmem [shape: f32[4,4,128], index: 2, kind: input, shape index: {}]
  %s3 = inlined_call_operand.vmem [shape: f32[4,128,1], index: 3, kind: input, shape index: {}]
  %s4 = inlined_call_operand.hbm [shape: f32[16,1,128], index: 4, kind: output, shape index: {}]
  %s5 = sld [smem:[#allocation0]]
  $region56: #{tpu_custom_call.1} parent=0
    _
  %s7 = ssub.s32 1, %s5
  %s8 = scalar_select 0, %s7, %s5
  $region1: #{tpu_custom_call.1} parent=0
    #allocation2 [shape = 'u8[8192]{0}', space=vmem, size = 0x2000, scoped, tag = 'output window, operand 0']
    #allocation3 [shape = 's32[2]{0}', space=sflag, size = 0x8, scoped, tag = 'scoped memory for tpu_custom_call.1']
    %9 = vsyncpa [#allocation3], 0
    %s10 = scalar_lea.sflag [#allocation3], 1
    %11 = vsyncpa %s10, 0
    loop: start=0, step=1, limit=4
    $region2: #{tpu_custom_call.1} parent=1 // loop_pre_header
      _
    $region3: #{tpu_custom_call.1} parent=1 // loop_header
      %s13 = sphi 0, %s17
      %p14 = scmp.ge.s32.totalorder %s13, 4
      %s23 = sphi 0, %s25
      %s26 = sphi 0, %s23
      %s27 = sphi 0, %s26
      %s43 = sphi 0, %s27
      %s49 = sphi 0, %s51
      %s52 = sphi 0, %s49
      %s53 = sphi 0, %s52
      %s69 = sphi 0, %s53
      %s73 = sphi 0, %s73
      %s75 = sphi 0, %s73
      %s76 = sphi 0, %s75
      %s90 = sphi 0, %s76
      %s94 = sphi 0, %s94
      %s96 = sphi 0, %s94
      %s97 = sphi 0, %s96
      %s111 = sphi 0, %s97
      %s117 = sphi 0, %s119
      %s120 = sphi 0, %s117
      %s121 = sphi 0, %s120
      %s137 = sphi 0, %s121
    $region4: #{tpu_custom_call.1} parent=1 // loop_header_branch
      %16 = sbr.rel (%p14) target = $region8
    $region5: #{tpu_custom_call.1} parent=1 // loop_body
      %s18 = ssub.s32 %s13, 1
      %s19 = ssub.s32 %s13, 2
      %s20 = sadd.s32 %s13, 1
      %s21 = ssub.s32 %s13, %s20
      %p22 = scmp.eq.s32.totalorder %s21, 0
      %s24 = sadd.s32 %s23, 1
      %s25 = scalar_select %p22, %s23, %s24
      %p28 = pneg %p22
      %p29 = scmp.eq.s32.totalorder %s13, 1
      %p30 = por %p28, %p29
      %p31 = scmp.ne.s32.totalorder %s23, %s26
      %p32 = scmp.eq.s32.totalorder %s13, 0
      %p33 = por %p31, %p32
      %p34 = scmp.ne.s32.totalorder %s23, %s26
      %p35 = scmp.eq.s32.totalorder %s18, 1
      %p36 = por %p34, %p35
      %p37 = scmp.ne.s32.totalorder %s26, %s27
      %p38 = scmp.eq.s32.totalorder %s18, 0
      %p39 = por %p37, %p38
      %p40 = scmp.ne.s32.totalorder %s26, %s27
      %p41 = scmp.eq.s32.totalorder %s19, 1
      %p42 = por %p40, %p41
      %p44 = scmp.ne.s32.totalorder %s27, %s43
      %p45 = scmp.eq.s32.totalorder %s19, 0
      %p46 = por %p44, %p45
      %s47 = ssub.s32 %s13, %s20
      %p48 = scmp.eq.s32.totalorder %s47, 0
      %s50 = sadd.s32 %s49, 1
      %s51 = scalar_select %p48, %s49, %s50
      %p54 = pneg %p48
      %p55 = scmp.eq.s32.totalorder %s13, 1
      %p56 = por %p54, %p55
      %p57 = scmp.ne.s32.totalorder %s49, %s52
      %p58 = scmp.eq.s32.totalorder %s13, 0
      %p59 = por %p57, %p58
      %p60 = scmp.ne.s32.totalorder %s49, %s52
      %p61 = scmp.eq.s32.totalorder %s18, 1
      %p62 = por %p60, %p61
      %p63 = scmp.ne.s32.totalorder %s52, %s53
      %p64 = scmp.eq.s32.totalorder %s18, 0
      %p65 = por %p63, %p64
      %p66 = scmp.ne.s32.totalorder %s52, %s53
      %p67 = scmp.eq.s32.totalorder %s19, 1
      %p68 = por %p66, %p67
      %p70 = scmp.ne.s32.totalorder %s53, %s69
      %p71 = scmp.eq.s32.totalorder %s19, 0
      %p72 = por %p70, %p71
      %s74 = sadd.s32 %s73, 1
      %p77 = scmp.eq.s32.totalorder %s13, 1
      %p78 = scmp.ne.s32.totalorder %s73, %s75
      %p79 = scmp.eq.s32.totalorder %s13, 0
      %p80 = por %p78, %p79
      %p81 = scmp.ne.s32.totalorder %s73, %s75
      %p82 = scmp.eq.s32.totalorder %s18, 1
      %p83 = por %p81, %p82
      %p84 = scmp.ne.s32.totalorder %s75, %s76
      %p85 = scmp.eq.s32.totalorder %s18, 0
      %p86 = por %p84, %p85
      %p87 = scmp.ne.s32.totalorder %s75, %s76
      %p88 = scmp.eq.s32.totalorder %s19, 1
      %p89 = por %p87, %p88
      %p91 = scmp.ne.s32.totalorder %s76, %s90
      %p92 = scmp.eq.s32.totalorder %s19, 0
      %p93 = por %p91, %p92
      %s95 = sadd.s32 %s94, 1
      %p98 = scmp.eq.s32.totalorder %s13, 1
      %p99 = scmp.ne.s32.totalorder %s94, %s96
      %p100 = scmp.eq.s32.totalorder %s13, 0
      %p101 = por %p99, %p100
      %p102 = scmp.ne.s32.totalorder %s94, %s96
      %p103 = scmp.eq.s32.totalorder %s18, 1
      %p104 = por %p102, %p103
      %p105 = scmp.ne.s32.totalorder %s96, %s97
      %p106 = scmp.eq.s32.totalorder %s18, 0
      %p107 = por %p105, %p106
      %p108 = scmp.ne.s32.totalorder %s96, %s97
      %p109 = scmp.eq.s32.totalorder %s19, 1
      %p110 = por %p108, %p109
      %p112 = scmp.ne.s32.totalorder %s97, %s111
      %p113 = scmp.eq.s32.totalorder %s19, 0
      %p114 = por %p112, %p113
      %s115 = ssub.s32 %s13, %s20
      %p116 = scmp.eq.s32.totalorder %s115, 0
      %s118 = sadd.s32 %s117, 1
      %s119 = scalar_select %p116, %s117, %s118
      %p122 = pneg %p116
      %p123 = scmp.eq.s32.totalorder %s13, 1
      %p124 = por %p122, %p123
      %p125 = scmp.ne.s32.totalorder %s117, %s120
      %p126 = scmp.eq.s32.totalorder %s13, 0
      %p127 = por %p125, %p126
      %p128 = scmp.ne.s32.totalorder %s117, %s120
      %p129 = scmp.eq.s32.totalorder %s18, 1
      %p130 = por %p128, %p129
      %p131 = scmp.ne.s32.totalorder %s120, %s121
      %p132 = scmp.eq.s32.totalorder %s18, 0
      %p133 = por %p131, %p132
      %p134 = scmp.ne.s32.totalorder %s120, %s121
      %p135 = scmp.eq.s32.totalorder %s19, 1
      %p136 = por %p134, %p135
      %p138 = scmp.ne.s32.totalorder %s121, %s137
      %p139 = scmp.eq.s32.totalorder %s19, 0
      %p140 = por %p138, %p139
      %p141 = scmp.le.s32.totalorder 1, %s13
      %p142 = scmp.lt.s32.totalorder %s13, 3
      %p143 = pnand %p141, %p142
      %p144 = pneg %p143
      // Predicated region
      $region9: #{tpu_custom_call.1} parent=5 // pred_check
        _
      $region10: #{tpu_custom_call.1} parent=5 // pred_check_branch
        %146 = sbr.rel (%p143) target = $region12
      $region11: #{tpu_custom_call.1} parent=5 // pred_region
        %s147 = ssub.s32 %s13, 1
        // Predicated region
        $region13: #{tpu_custom_call.1} parent=11 // pred_check
          %p148 = pneg %p86
        $region14: #{tpu_custom_call.1} parent=11 // pred_check_branch
          %150 = sbr.rel (%p148) target = $region16
        $region15: #{tpu_custom_call.1} parent=11 // pred_region
          _
        $region16: #{tpu_custom_call.1} parent=11 // pred_fallthru
          _
        // Predicated region
        $region17: #{tpu_custom_call.1} parent=11 // pred_check
          %p151 = pneg %p107
        $region18: #{tpu_custom_call.1} parent=11 // pred_check_branch
          %153 = sbr.rel (%p151) target = $region20
        $region19: #{tpu_custom_call.1} parent=11 // pred_region
          _
        $region20: #{tpu_custom_call.1} parent=11 // pred_fallthru
          _
      $region12: #{tpu_custom_call.1} parent=5 // pred_fallthru
        _
      %p154 = scmp.lt.s32.totalorder %s13, 2
      // Predicated region
      $region21: #{tpu_custom_call.1} parent=5 // pred_check
        %p155 = pneg %p154
      $region22: #{tpu_custom_call.1} parent=5 // pred_check_branch
        %157 = sbr.rel (%p155) target = $region24
      $region23: #{tpu_custom_call.1} parent=5 // pred_region
        // Predicated region
        $region25: #{tpu_custom_call.1} parent=23 // pred_check
          %p158 = pneg %p33
        $region26: #{tpu_custom_call.1} parent=23 // pred_check_branch
          %160 = sbr.rel (%p158) target = $region28
        $region27: #{tpu_custom_call.1} parent=23 // pred_region
          %s161 = smul.u32 8, %s13
          %p162 = scmp.lt.s32.totalorder %s161, 15
          %s163 = scalar_select %p162, %s161, 15
          %s164 = scalar_lea.vmem %s0, %s163
          %s165 = smul.u32 8, %s13
        $region28: #{tpu_custom_call.1} parent=23 // pred_fallthru
          _
        // Predicated region
        $region29: #{tpu_custom_call.1} parent=23 // pred_check
          %p166 = pneg %p59
        $region30: #{tpu_custom_call.1} parent=23 // pred_check_branch
          %168 = sbr.rel (%p166) target = $region32
        $region31: #{tpu_custom_call.1} parent=23 // pred_region
          %s169 = smul.u32 8, %s13
          %p170 = scmp.lt.s32.totalorder %s169, 15
          %s171 = scalar_select %p170, %s169, 15
          %s172 = smul.addr %s171, 16
          %s173 = smul.addr %s172, 8
          %s174 = scalar_lea.vmem %s1, %s173
          %s175 = smul.u32 8, %s13
        $region32: #{tpu_custom_call.1} parent=23 // pred_fallthru
          _
      $region24: #{tpu_custom_call.1} parent=5 // pred_fallthru
        _
      %p176 = scmp.le.s32.totalorder 1, %s13
      %p177 = scmp.lt.s32.totalorder %s13, 3
      %p178 = pnand %p176, %p177
      %p179 = pneg %p178
      // Predicated region
      $region33: #{tpu_custom_call.1} parent=5 // pred_check
        _
      $region34: #{tpu_custom_call.1} parent=5 // pred_check_branch
        %181 = sbr.rel (%p178) target = $region36
      $region35: #{tpu_custom_call.1} parent=5 // pred_region
        %s182 = ssub.s32 %s13, 1
        %s183 = smul.u32 8, %s18
        %p184 = scmp.lt.s32.totalorder %s183, 15
        %s185 = scalar_select %p184, %s183, 15
        %s186 = scalar_lea.vmem %s0, %s185
        %p187 = pneg %p39
        %p188 = pneg %p36
        %s189 = smul.u32 8, %s18
        %p190 = scmp.lt.s32.totalorder %s189, 15
        %s191 = scalar_select %p190, %s189, 15
        %s192 = smul.addr %s191, 16
        %s193 = smul.addr %s192, 8
        %s194 = scalar_lea.vmem %s1, %s193
        %p195 = pneg %p65
        %p196 = pneg %p62
        %p197 = pneg %p86
        %p198 = pneg %p83
        %p199 = pneg %p107
        %p200 = pneg %p104
        %p201 = pneg %p133
        %p202 = pneg %p130
        %s203 = sand.u32 %s120, 1
        %s204 = scalar_lea.sflag [#allocation3], %s203
        %s205 = sand.u32 %s120, 1
        %s206 = smul.addr %s205, 8
        %s207 = scalar_lea.vmem [#allocation2], %s206
        %s208 = smul.u32 8, %s18
        %p209 = scmp.lt.s32.totalorder %s208, 15
        %s210 = scalar_select %p209, %s208, 15
        %s211 = scalar_lea.vmem %s0, %s210
        %s212 = smul.u32 8, %s18
        %s213 = smul.u32 8, %s18
        %p214 = scmp.lt.s32.totalorder %s213, 15
        %s215 = scalar_select %p214, %s213, 15
        %s216 = smul.addr %s215, 16
        %s217 = smul.addr %s216, 8
        %s218 = scalar_lea.vmem %s1, %s217
        %s219 = smul.u32 8, %s18
        %s220 = smul.u32 8, %s18
        %v221 = vld [vmem:[%s2] sm:$0xf]
        %v222 = vld [vmem:[%s2 + $0x4] sm:$0xf]
        %v223 = vld [vmem:[%s2 + $0x8] sm:$0xf]
        %v224 = vld [vmem:[%s2 + $0xc] sm:$0xf]
        loop: start=0, step=1, limit=8
        $region37: #{tpu_custom_call.1} parent=35 // loop_pre_header
          _
        $region38: #{tpu_custom_call.1} parent=35 // loop_header
          %s226 = sphi 0, %s230
          %p227 = scmp.ge.s32.totalorder %s226, 8
        $region39: #{tpu_custom_call.1} parent=35 // loop_header_branch
          %229 = sbr.rel (%p227) target = $region43
        $region40: #{tpu_custom_call.1} parent=35 // loop_body
          %s231 = scalar_lea.vmem %s211, %s226
          %v232 = vld [vmem:[%s231] sm:$0x1]
          %s233 = smul.u32 %s226, 128
          %s234 = scalar_lea.vmem %s218, %s233
          %v235 = vld [vmem:[%s234] sm:$0xff]
          %v236 = vld [vmem:[%s234 + $0x8] sm:$0xff]
          %v237 = vld [vmem:[%s234 + $0x10] sm:$0xff]
          %v238 = vld [vmem:[%s234 + $0x18] sm:$0xff]
          %v239 = vld [vmem:[%s234 + $0x20] sm:$0xff]
          %v240 = vld [vmem:[%s234 + $0x28] sm:$0xff]
          %v241 = vld [vmem:[%s234 + $0x30] sm:$0xff]
          %v242 = vld [vmem:[%s234 + $0x38] sm:$0xff]
          %v243 = vld [vmem:[%s234 + $0x40] sm:$0xff]
          %v244 = vld [vmem:[%s234 + $0x48] sm:$0xff]
          %v245 = vld [vmem:[%s234 + $0x50] sm:$0xff]
          %v246 = vld [vmem:[%s234 + $0x58] sm:$0xff]
          %v247 = vld [vmem:[%s234 + $0x60] sm:$0xff]
          %v248 = vld [vmem:[%s234 + $0x68] sm:$0xff]
          %v249 = vld [vmem:[%s234 + $0x70] sm:$0xff]
          %v250 = vld [vmem:[%s234 + $0x78] sm:$0xff]
          %v251 = vmul.f32 %v232, %v232
          %v253 = vperm.slane %v232, 0
          %v255 = vmul.f32 %v253, %v221
          %v256 = vmul.f32 %v253, %v222
          %v258 = vperm.slane %v251, 0
          %v260 = vmul.f32 %v258, %v223
          %v261 = vmul.f32 %v253, %v224
          %vm262 = vcmask 1043456
          %v263 = vsel %vm262, %v256, -inf
          %264 = vmax.xlane.f32.xlu0 %v263
          %v265 = vpop.xlane.xlu0 %264
          %v266 = vsel %vm262, %v256, inf
          %267 = vmin.xlane.f32.xlu0 %v266
          %v268 = vpop.xlane.xlu0 %267
          %v269 = vmul.f32 %v255, %v265
          %v270 = vmul.f32 %v255, %v268
          %v271 = vmax.f32 %v269, %v270
          %v272 = vsub.f32 %v260, %v271
          %v273 = vmul.f32 %v272, 1.442695
          %v274 = vpow.pop %v273
          %v275 = vld [vmem:[%s3] sm:$0xff]
          %v276 = vld [vmem:[%s3 + $0x8] sm:$0xff]
          %v277 = vld [vmem:[%s3 + $0x10] sm:$0xff]
          %v278 = vld [vmem:[%s3 + $0x18] sm:$0xff]
          %v279 = vld [vmem:[%s3 + $0x20] sm:$0xff]
          %v280 = vld [vmem:[%s3 + $0x28] sm:$0xff]
          %v281 = vld [vmem:[%s3 + $0x30] sm:$0xff]
          %v282 = vld [vmem:[%s3 + $0x38] sm:$0xff]
          %v283 = vld [vmem:[%s3 + $0x40] sm:$0xff]
          %v284 = vld [vmem:[%s3 + $0x48] sm:$0xff]
          %v285 = vld [vmem:[%s3 + $0x50] sm:$0xff]
          %v286 = vld [vmem:[%s3 + $0x58] sm:$0xff]
          %v287 = vld [vmem:[%s3 + $0x60] sm:$0xff]
          %v288 = vld [vmem:[%s3 + $0x68] sm:$0xff]
          %v289 = vld [vmem:[%s3 + $0x70] sm:$0xff]
          %v290 = vld [vmem:[%s3 + $0x78] sm:$0xff]
          %v291 = vmul.f32 %v235, %v275
          %v292 = vmul.f32 %v236, %v276
          %v293 = vmul.f32 %v237, %v277
          %v294 = vmul.f32 %v238, %v278
          %v295 = vmul.f32 %v239, %v279
          %v296 = vmul.f32 %v240, %v280
          %v297 = vmul.f32 %v241, %v281
          %v298 = vmul.f32 %v242, %v282
          %v299 = vmul.f32 %v243, %v283
          %v300 = vmul.f32 %v244, %v284
          %v301 = vmul.f32 %v245, %v285
          %v302 = vmul.f32 %v246, %v286
          %v303 = vmul.f32 %v247, %v287
          %v304 = vmul.f32 %v248, %v288
          %v305 = vmul.f32 %v249, %v289
          %v306 = vmul.f32 %v250, %v290
          %308 = vset.pattern.permute.xlu0 0
          %309 = vperm.xlu0 %308, %v291
          %v310 = vpop.permute.xlu0 %309
          %313 = vset.pattern.permute.xlu0 0
          %314 = vperm.xlu0 %313, %v292
          %v315 = vpop.permute.xlu0 %314
          %318 = vset.pattern.permute.xlu0 0
          %319 = vperm.xlu0 %318, %v293
          %v320 = vpop.permute.xlu0 %319
          %323 = vset.pattern.permute.xlu0 0
          %324 = vperm.xlu0 %323, %v294
          %v325 = vpop.permute.xlu0 %324
          %328 = vset.pattern.permute.xlu0 0
          %329 = vperm.xlu0 %328, %v295
          %v330 = vpop.permute.xlu0 %329
          %333 = vset.pattern.permute.xlu0 0
          %334 = vperm.xlu0 %333, %v296
          %v335 = vpop.permute.xlu0 %334
          %338 = vset.pattern.permute.xlu0 0
          %339 = vperm.xlu0 %338, %v297
          %v340 = vpop.permute.xlu0 %339
          %343 = vset.pattern.permute.xlu0 0
          %344 = vperm.xlu0 %343, %v298
          %v345 = vpop.permute.xlu0 %344
          %348 = vset.pattern.permute.xlu0 0
          %349 = vperm.xlu0 %348, %v299
          %v350 = vpop.permute.xlu0 %349
          %353 = vset.pattern.permute.xlu0 0
          %354 = vperm.xlu0 %353, %v300
          %v355 = vpop.permute.xlu0 %354
          %358 = vset.pattern.permute.xlu0 0
          %359 = vperm.xlu0 %358, %v301
          %v360 = vpop.permute.xlu0 %359
          %363 = vset.pattern.permute.xlu0 0
          %364 = vperm.xlu0 %363, %v302
          %v365 = vpop.permute.xlu0 %364
          %368 = vset.pattern.permute.xlu0 0
          %369 = vperm.xlu0 %368, %v303
          %v370 = vpop.permute.xlu0 %369
          %373 = vset.pattern.permute.xlu0 0
          %374 = vperm.xlu0 %373, %v304
          %v375 = vpop.permute.xlu0 %374
          %378 = vset.pattern.permute.xlu0 0
          %379 = vperm.xlu0 %378, %v305
          %v380 = vpop.permute.xlu0 %379
          %383 = vset.pattern.permute.xlu0 0
          %384 = vperm.xlu0 %383, %v306
          %v385 = vpop.permute.xlu0 %384
          %v387 = vperm.slane %v255, 0
          %v388 = vmul.f32 %v310, %v387
          %v389 = vmul.f32 %v315, %v387
          %v390 = vmul.f32 %v320, %v387
          %v391 = vmul.f32 %v325, %v387
          %v392 = vmul.f32 %v330, %v387
          %v393 = vmul.f32 %v335, %v387
          %v394 = vmul.f32 %v340, %v387
          %v395 = vmul.f32 %v345, %v387
          %v396 = vmul.f32 %v350, %v387
          %v397 = vmul.f32 %v355, %v387
          %v398 = vmul.f32 %v360, %v387
          %v399 = vmul.f32 %v365, %v387
          %v400 = vmul.f32 %v370, %v387
          %v401 = vmul.f32 %v375, %v387
          %v402 = vmul.f32 %v380, %v387
          %v403 = vmul.f32 %v385, %v387
          %v404 = vperm.slane %v271, 0
          %v405 = vsub.f32 %v388, %v404
          %v406 = vsub.f32 %v389, %v404
          %v407 = vsub.f32 %v390, %v404
          %v408 = vsub.f32 %v391, %v404
          %v409 = vsub.f32 %v392, %v404
          %v410 = vsub.f32 %v393, %v404
          %v411 = vsub.f32 %v394, %v404
          %v412 = vsub.f32 %v395, %v404
          %v413 = vsub.f32 %v396, %v404
          %v414 = vsub.f32 %v397, %v404
          %v415 = vsub.f32 %v398, %v404
          %v416 = vsub.f32 %v399, %v404
          %v417 = vsub.f32 %v400, %v404
          %v418 = vsub.f32 %v401, %v404
          %v419 = vsub.f32 %v402, %v404
          %v420 = vsub.f32 %v403, %v404
          %v421 = vmul.f32 %v405, 1.442695
          %v422 = vpow.pop %v421
          %v423 = vmul.f32 %v406, 1.442695
          %v424 = vpow.pop %v423
          %v425 = vmul.f32 %v407, 1.442695
          %v426 = vpow.pop %v425
          %v427 = vmul.f32 %v408, 1.442695
          %v428 = vpow.pop %v427
          %v429 = vmul.f32 %v409, 1.442695
          %v430 = vpow.pop %v429
          %v431 = vmul.f32 %v410, 1.442695
          %v432 = vpow.pop %v431
          %v433 = vmul.f32 %v411, 1.442695
          %v434 = vpow.pop %v433
          %v435 = vmul.f32 %v412, 1.442695
          %v436 = vpow.pop %v435
          %v437 = vmul.f32 %v413, 1.442695
          %v438 = vpow.pop %v437
          %v439 = vmul.f32 %v414, 1.442695
          %v440 = vpow.pop %v439
          %v441 = vmul.f32 %v415, 1.442695
          %v442 = vpow.pop %v441
          %v443 = vmul.f32 %v416, 1.442695
          %v444 = vpow.pop %v443
          %v445 = vmul.f32 %v417, 1.442695
          %v446 = vpow.pop %v445
          %v447 = vmul.f32 %v418, 1.442695
          %v448 = vpow.pop %v447
          %v449 = vmul.f32 %v419, 1.442695
          %v450 = vpow.pop %v449
          %v451 = vmul.f32 %v420, 1.442695
          %v452 = vpow.pop %v451
          %vm453 = vcmask 1040384
          %v454 = vsel %vm453, %v261, 1.0
          %455 = vmatpush.msra.mxu0 %v452
          %456 = vmatpush.msra.mxu0 %v450
          %457 = vmatpush.msra.mxu0 %v448
          %458 = vmatpush.msra.mxu0 %v446
          %459 = vmatpush.msra.mxu0 %v444
          %460 = vmatpush.msra.mxu0 %v442
          %461 = vmatpush.msra.mxu0 %v440
          %462 = vmatpush.msra.mxu0 %v438
          %463 = vmatpush.msra.mxu0 %v436
          %464 = vmatpush.msra.mxu0 %v434
          %465 = vmatpush.msra.mxu0 %v432
          %466 = vmatpush.msra.mxu0 %v430
          %467 = vmatpush.msra.mxu0 %v428
          %468 = vmatpush.msra.mxu0 %v426
          %469 = vmatpush.msra.mxu0 %v424
          %470 = vmatpush.msra.mxu0 %v422
          %471 = vmatmul.f32.gmra.mxu0 %v454
          %v472 = vpop.f32.mrf.mxu0
          %v473 = vadd.f32 0.0, %v472
          %474 = vdwg.mxu0
          %v475 = vmul.f32 %v274, %v261
          %v476 = vsub.f32 %v473, %v475
          %v477 = vrcp.pop %v473
          %v479 = vrot.slane %v477, 1
          %v481 = vmul.f32 %v476, %v479
          %v482 = vadd.f32 %v481, 0.0
          %s483 = scalar_lea.vmem %s3, 128
          %v484 = vld [vmem:[%s483] sm:$0xff]
          %v485 = vld [vmem:[%s483 + $0x8] sm:$0xff]
          %v486 = vld [vmem:[%s483 + $0x10] sm:$0xff]
          %v487 = vld [vmem:[%s483 + $0x18] sm:$0xff]
          %v488 = vld [vmem:[%s483 + $0x20] sm:$0xff]
          %v489 = vld [vmem:[%s483 + $0x28] sm:$0xff]
          %v490 = vld [vmem:[%s483 + $0x30] sm:$0xff]
          %v491 = vld [vmem:[%s483 + $0x38] sm:$0xff]
          %v492 = vld [vmem:[%s483 + $0x40] sm:$0xff]
          %v493 = vld [vmem:[%s483 + $0x48] sm:$0xff]
          %v494 = vld [vmem:[%s483 + $0x50] sm:$0xff]
          %v495 = vld [vmem:[%s483 + $0x58] sm:$0xff]
          %v496 = vld [vmem:[%s483 + $0x60] sm:$0xff]
          %v497 = vld [vmem:[%s483 + $0x68] sm:$0xff]
          %v498 = vld [vmem:[%s483 + $0x70] sm:$0xff]
          %v499 = vld [vmem:[%s483 + $0x78] sm:$0xff]
          %v500 = vmul.f32 %v235, %v484
          %v501 = vmul.f32 %v236, %v485
          %v502 = vmul.f32 %v237, %v486
          %v503 = vmul.f32 %v238, %v487
          %v504 = vmul.f32 %v239, %v488
          %v505 = vmul.f32 %v240, %v489
          %v506 = vmul.f32 %v241, %v490
          %v507 = vmul.f32 %v242, %v491
          %v508 = vmul.f32 %v243, %v492
          %v509 = vmul.f32 %v244, %v493
          %v510 = vmul.f32 %v245, %v494
          %v511 = vmul.f32 %v246, %v495
          %v512 = vmul.f32 %v247, %v496
          %v513 = vmul.f32 %v248, %v497
          %v514 = vmul.f32 %v249, %v498
          %v515 = vmul.f32 %v250, %v499
          %517 = vset.pattern.permute.xlu0 0
          %518 = vperm.xlu0 %517, %v500
          %v519 = vpop.permute.xlu0 %518
          %522 = vset.pattern.permute.xlu0 0
          %523 = vperm.xlu0 %522, %v501
          %v524 = vpop.permute.xlu0 %523
          %527 = vset.pattern.permute.xlu0 0
          %528 = vperm.xlu0 %527, %v502
          %v529 = vpop.permute.xlu0 %528
          %532 = vset.pattern.permute.xlu0 0
          %533 = vperm.xlu0 %532, %v503
          %v534 = vpop.permute.xlu0 %533
          %537 = vset.pattern.permute.xlu0 0
          %538 = vperm.xlu0 %537, %v504
          %v539 = vpop.permute.xlu0 %538
          %542 = vset.pattern.permute.xlu0 0
          %543 = vperm.xlu0 %542, %v505
          %v544 = vpop.permute.xlu0 %543
          %547 = vset.pattern.permute.xlu0 0
          %548 = vperm.xlu0 %547, %v506
          %v549 = vpop.permute.xlu0 %548
          %552 = vset.pattern.permute.xlu0 0
          %553 = vperm.xlu0 %552, %v507
          %v554 = vpop.permute.xlu0 %553
          %557 = vset.pattern.permute.xlu0 0
          %558 = vperm.xlu0 %557, %v508
          %v559 = vpop.permute.xlu0 %558
          %562 = vset.pattern.permute.xlu0 0
          %563 = vperm.xlu0 %562, %v509
          %v564 = vpop.permute.xlu0 %563
          %567 = vset.pattern.permute.xlu0 0
          %568 = vperm.xlu0 %567, %v510
          %v569 = vpop.permute.xlu0 %568
          %572 = vset.pattern.permute.xlu0 0
          %573 = vperm.xlu0 %572, %v511
          %v574 = vpop.permute.xlu0 %573
          %577 = vset.pattern.permute.xlu0 0
          %578 = vperm.xlu0 %577, %v512
          %v579 = vpop.permute.xlu0 %578
          %582 = vset.pattern.permute.xlu0 0
          %583 = vperm.xlu0 %582, %v513
          %v584 = vpop.permute.xlu0 %583
          %587 = vset.pattern.permute.xlu0 0
          %588 = vperm.xlu0 %587, %v514
          %v589 = vpop.permute.xlu0 %588
          %592 = vset.pattern.permute.xlu0 0
          %593 = vperm.xlu0 %592, %v515
          %v594 = vpop.permute.xlu0 %593
          %v596 = vperm.slane %v255, 1
          %v597 = vmul.f32 %v519, %v596
          %v598 = vmul.f32 %v524, %v596
          %v599 = vmul.f32 %v529, %v596
          %v600 = vmul.f32 %v534, %v596
          %v601 = vmul.f32 %v539, %v596
          %v602 = vmul.f32 %v544, %v596
          %v603 = vmul.f32 %v549, %v596
          %v604 = vmul.f32 %v554, %v596
          %v605 = vmul.f32 %v559, %v596
          %v606 = vmul.f32 %v564, %v596
          %v607 = vmul.f32 %v569, %v596
          %v608 = vmul.f32 %v574, %v596
          %v609 = vmul.f32 %v579, %v596
          %v610 = vmul.f32 %v584, %v596
          %v611 = vmul.f32 %v589, %v596
          %v612 = vmul.f32 %v594, %v596
          %v613 = vperm.slane %v271, 1
          %v614 = vsub.f32 %v597, %v613
          %v615 = vsub.f32 %v598, %v613
          %v616 = vsub.f32 %v599, %v613
          %v617 = vsub.f32 %v600, %v613
          %v618 = vsub.f32 %v601, %v613
          %v619 = vsub.f32 %v602, %v613
          %v620 = vsub.f32 %v603, %v613
          %v621 = vsub.f32 %v604, %v613
          %v622 = vsub.f32 %v605, %v613
          %v623 = vsub.f32 %v606, %v613
          %v624 = vsub.f32 %v607, %v613
          %v625 = vsub.f32 %v608, %v613
          %v626 = vsub.f32 %v609, %v613
          %v627 = vsub.f32 %v610, %v613
          %v628 = vsub.f32 %v611, %v613
          %v629 = vsub.f32 %v612, %v613
          %v630 = vmul.f32 %v614, 1.442695
          %v631 = vpow.pop %v630
          %v632 = vmul.f32 %v615, 1.442695
          %v633 = vpow.pop %v632
          %v634 = vmul.f32 %v616, 1.442695
          %v635 = vpow.pop %v634
          %v636 = vmul.f32 %v617, 1.442695
          %v637 = vpow.pop %v636
          %v638 = vmul.f32 %v618, 1.442695
          %v639 = vpow.pop %v638
          %v640 = vmul.f32 %v619, 1.442695
          %v641 = vpow.pop %v640
          %v642 = vmul.f32 %v620, 1.442695
          %v643 = vpow.pop %v642
          %v644 = vmul.f32 %v621, 1.442695
          %v645 = vpow.pop %v644
          %v646 = vmul.f32 %v622, 1.442695
          %v647 = vpow.pop %v646
          %v648 = vmul.f32 %v623, 1.442695
          %v649 = vpow.pop %v648
          %v650 = vmul.f32 %v624, 1.442695
          %v651 = vpow.pop %v650
          %v652 = vmul.f32 %v625, 1.442695
          %v653 = vpow.pop %v652
          %v654 = vmul.f32 %v626, 1.442695
          %v655 = vpow.pop %v654
          %v656 = vmul.f32 %v627, 1.442695
          %v657 = vpow.pop %v656
          %v658 = vmul.f32 %v628, 1.442695
          %v659 = vpow.pop %v658
          %v660 = vmul.f32 %v629, 1.442695
          %v661 = vpow.pop %v660
          %v663 = vrot.slane %v261, 1
          %v665 = vsel %vm453, %v663, 1.0
          %666 = vmatpush.msra.mxu0 %v661
          %667 = vmatpush.msra.mxu0 %v659
          %668 = vmatpush.msra.mxu0 %v657
          %669 = vmatpush.msra.mxu0 %v655
          %670 = vmatpush.msra.mxu0 %v653
          %671 = vmatpush.msra.mxu0 %v651
          %672 = vmatpush.msra.mxu0 %v649
          %673 = vmatpush.msra.mxu0 %v647
          %674 = vmatpush.msra.mxu0 %v645
          %675 = vmatpush.msra.mxu0 %v643
          %676 = vmatpush.msra.mxu0 %v641
          %677 = vmatpush.msra.mxu0 %v639
          %678 = vmatpush.msra.mxu0 %v637
          %679 = vmatpush.msra.mxu0 %v635
          %680 = vmatpush.msra.mxu0 %v633
          %681 = vmatpush.msra.mxu0 %v631
          %682 = vmatmul.f32.gmra.mxu0 %v665
          %v683 = vpop.f32.mrf.mxu0
          %v684 = vadd.f32 0.0, %v683
          %685 = vdwg.mxu0
          %v687 = vrot.slane %v475, 1
          %v689 = vsub.f32 %v684, %v687
          %v690 = vrcp.pop %v684
          %v692 = vrot.slane %v690, 1
          %v694 = vmul.f32 %v689, %v692
          %v695 = vadd.f32 %v482, %v694
          %s696 = scalar_lea.vmem %s3, 256
          %v697 = vld [vmem:[%s696] sm:$0xff]
          %v698 = vld [vmem:[%s696 + $0x8] sm:$0xff]
          %v699 = vld [vmem:[%s696 + $0x10] sm:$0xff]
          %v700 = vld [vmem:[%s696 + $0x18] sm:$0xff]
          %v701 = vld [vmem:[%s696 + $0x20] sm:$0xff]
          %v702 = vld [vmem:[%s696 + $0x28] sm:$0xff]
          %v703 = vld [vmem:[%s696 + $0x30] sm:$0xff]
          %v704 = vld [vmem:[%s696 + $0x38] sm:$0xff]
          %v705 = vld [vmem:[%s696 + $0x40] sm:$0xff]
          %v706 = vld [vmem:[%s696 + $0x48] sm:$0xff]
          %v707 = vld [vmem:[%s696 + $0x50] sm:$0xff]
          %v708 = vld [vmem:[%s696 + $0x58] sm:$0xff]
          %v709 = vld [vmem:[%s696 + $0x60] sm:$0xff]
          %v710 = vld [vmem:[%s696 + $0x68] sm:$0xff]
          %v711 = vld [vmem:[%s696 + $0x70] sm:$0xff]
          %v712 = vld [vmem:[%s696 + $0x78] sm:$0xff]
          %v713 = vmul.f32 %v235, %v697
          %v714 = vmul.f32 %v236, %v698
          %v715 = vmul.f32 %v237, %v699
          %v716 = vmul.f32 %v238, %v700
          %v717 = vmul.f32 %v239, %v701
          %v718 = vmul.f32 %v240, %v702
          %v719 = vmul.f32 %v241, %v703
          %v720 = vmul.f32 %v242, %v704
          %v721 = vmul.f32 %v243, %v705
          %v722 = vmul.f32 %v244, %v706
          %v723 = vmul.f32 %v245, %v707
          %v724 = vmul.f32 %v246, %v708
          %v725 = vmul.f32 %v247, %v709
          %v726 = vmul.f32 %v248, %v710
          %v727 = vmul.f32 %v249, %v711
          %v728 = vmul.f32 %v250, %v712
          %730 = vset.pattern.permute.xlu0 0
          %731 = vperm.xlu0 %730, %v713
          %v732 = vpop.permute.xlu0 %731
          %735 = vset.pattern.permute.xlu0 0
          %736 = vperm.xlu0 %735, %v714
          %v737 = vpop.permute.xlu0 %736
          %740 = vset.pattern.permute.xlu0 0
          %741 = vperm.xlu0 %740, %v715
          %v742 = vpop.permute.xlu0 %741
          %745 = vset.pattern.permute.xlu0 0
          %746 = vperm.xlu0 %745, %v716
          %v747 = vpop.permute.xlu0 %746
          %750 = vset.pattern.permute.xlu0 0
          %751 = vperm.xlu0 %750, %v717
          %v752 = vpop.permute.xlu0 %751
          %755 = vset.pattern.permute.xlu0 0
          %756 = vperm.xlu0 %755, %v718
          %v757 = vpop.permute.xlu0 %756
          %760 = vset.pattern.permute.xlu0 0
          %761 = vperm.xlu0 %760, %v719
          %v762 = vpop.permute.xlu0 %761
          %765 = vset.pattern.permute.xlu0 0
          %766 = vperm.xlu0 %765, %v720
          %v767 = vpop.permute.xlu0 %766
          %770 = vset.pattern.permute.xlu0 0
          %771 = vperm.xlu0 %770, %v721
          %v772 = vpop.permute.xlu0 %771
          %775 = vset.pattern.permute.xlu0 0
          %776 = vperm.xlu0 %775, %v722
          %v777 = vpop.permute.xlu0 %776
          %780 = vset.pattern.permute.xlu0 0
          %781 = vperm.xlu0 %780, %v723
          %v782 = vpop.permute.xlu0 %781
          %785 = vset.pattern.permute.xlu0 0
          %786 = vperm.xlu0 %785, %v724
          %v787 = vpop.permute.xlu0 %786
          %790 = vset.pattern.permute.xlu0 0
          %791 = vperm.xlu0 %790, %v725
          %v792 = vpop.permute.xlu0 %791
          %795 = vset.pattern.permute.xlu0 0
          %796 = vperm.xlu0 %795, %v726
          %v797 = vpop.permute.xlu0 %796
          %800 = vset.pattern.permute.xlu0 0
          %801 = vperm.xlu0 %800, %v727
          %v802 = vpop.permute.xlu0 %801
          %805 = vset.pattern.permute.xlu0 0
          %806 = vperm.xlu0 %805, %v728
          %v807 = vpop.permute.xlu0 %806
          %v809 = vperm.slane %v255, 2
          %v810 = vmul.f32 %v732, %v809
          %v811 = vmul.f32 %v737, %v809
          %v812 = vmul.f32 %v742, %v809
          %v813 = vmul.f32 %v747, %v809
          %v814 = vmul.f32 %v752, %v809
          %v815 = vmul.f32 %v757, %v809
          %v816 = vmul.f32 %v762, %v809
          %v817 = vmul.f32 %v767, %v809
          %v818 = vmul.f32 %v772, %v809
          %v819 = vmul.f32 %v777, %v809
          %v820 = vmul.f32 %v782, %v809
          %v821 = vmul.f32 %v787, %v809
          %v822 = vmul.f32 %v792, %v809
          %v823 = vmul.f32 %v797, %v809
          %v824 = vmul.f32 %v802, %v809
          %v825 = vmul.f32 %v807, %v809
          %v826 = vperm.slane %v271, 2
          %v827 = vsub.f32 %v810, %v826
          %v828 = vsub.f32 %v811, %v826
          %v829 = vsub.f32 %v812, %v826
          %v830 = vsub.f32 %v813, %v826
          %v831 = vsub.f32 %v814, %v826
          %v832 = vsub.f32 %v815, %v826
          %v833 = vsub.f32 %v816, %v826
          %v834 = vsub.f32 %v817, %v826
          %v835 = vsub.f32 %v818, %v826
          %v836 = vsub.f32 %v819, %v826
          %v837 = vsub.f32 %v820, %v826
          %v838 = vsub.f32 %v821, %v826
          %v839 = vsub.f32 %v822, %v826
          %v840 = vsub.f32 %v823, %v826
          %v841 = vsub.f32 %v824, %v826
          %v842 = vsub.f32 %v825, %v826
          %v843 = vmul.f32 %v827, 1.442695
          %v844 = vpow.pop %v843
          %v845 = vmul.f32 %v828, 1.442695
          %v846 = vpow.pop %v845
          %v847 = vmul.f32 %v829, 1.442695
          %v848 = vpow.pop %v847
          %v849 = vmul.f32 %v830, 1.442695
          %v850 = vpow.pop %v849
          %v851 = vmul.f32 %v831, 1.442695
          %v852 = vpow.pop %v851
          %v853 = vmul.f32 %v832, 1.442695
          %v854 = vpow.pop %v853
          %v855 = vmul.f32 %v833, 1.442695
          %v856 = vpow.pop %v855
          %v857 = vmul.f32 %v834, 1.442695
          %v858 = vpow.pop %v857
          %v859 = vmul.f32 %v835, 1.442695
          %v860 = vpow.pop %v859
          %v861 = vmul.f32 %v836, 1.442695
          %v862 = vpow.pop %v861
          %v863 = vmul.f32 %v837, 1.442695
          %v864 = vpow.pop %v863
          %v865 = vmul.f32 %v838, 1.442695
          %v866 = vpow.pop %v865
          %v867 = vmul.f32 %v839, 1.442695
          %v868 = vpow.pop %v867
          %v869 = vmul.f32 %v840, 1.442695
          %v870 = vpow.pop %v869
          %v871 = vmul.f32 %v841, 1.442695
          %v872 = vpow.pop %v871
          %v873 = vmul.f32 %v842, 1.442695
          %v874 = vpow.pop %v873
          %v875 = vrot.slane %v261, 2
          %v877 = vsel %vm453, %v875, 1.0
          %878 = vmatpush.msra.mxu0 %v874
          %879 = vmatpush.msra.mxu0 %v872
          %880 = vmatpush.msra.mxu0 %v870
          %881 = vmatpush.msra.mxu0 %v868
          %882 = vmatpush.msra.mxu0 %v866
          %883 = vmatpush.msra.mxu0 %v864
          %884 = vmatpush.msra.mxu0 %v862
          %885 = vmatpush.msra.mxu0 %v860
          %886 = vmatpush.msra.mxu0 %v858
          %887 = vmatpush.msra.mxu0 %v856
          %888 = vmatpush.msra.mxu0 %v854
          %889 = vmatpush.msra.mxu0 %v852
          %890 = vmatpush.msra.mxu0 %v850
          %891 = vmatpush.msra.mxu0 %v848
          %892 = vmatpush.msra.mxu0 %v846
          %893 = vmatpush.msra.mxu0 %v844
          %894 = vmatmul.f32.gmra.mxu0 %v877
          %v895 = vpop.f32.mrf.mxu0
          %v896 = vadd.f32 0.0, %v895
          %897 = vdwg.mxu0
          %v898 = vrot.slane %v475, 2
          %v900 = vsub.f32 %v896, %v898
          %v901 = vrcp.pop %v896
          %v903 = vrot.slane %v901, 1
          %v905 = vmul.f32 %v900, %v903
          %v906 = vadd.f32 %v695, %v905
          %s907 = scalar_lea.vmem %s3, 384
          %v908 = vld [vmem:[%s907] sm:$0xff]
          %v909 = vld [vmem:[%s907 + $0x8] sm:$0xff]
          %v910 = vld [vmem:[%s907 + $0x10] sm:$0xff]
          %v911 = vld [vmem:[%s907 + $0x18] sm:$0xff]
          %v912 = vld [vmem:[%s907 + $0x20] sm:$0xff]
          %v913 = vld [vmem:[%s907 + $0x28] sm:$0xff]
          %v914 = vld [vmem:[%s907 + $0x30] sm:$0xff]
          %v915 = vld [vmem:[%s907 + $0x38] sm:$0xff]
          %v916 = vld [vmem:[%s907 + $0x40] sm:$0xff]
          %v917 = vld [vmem:[%s907 + $0x48] sm:$0xff]
          %v918 = vld [vmem:[%s907 + $0x50] sm:$0xff]
          %v919 = vld [vmem:[%s907 + $0x58] sm:$0xff]
          %v920 = vld [vmem:[%s907 + $0x60] sm:$0xff]
          %v921 = vld [vmem:[%s907 + $0x68] sm:$0xff]
          %v922 = vld [vmem:[%s907 + $0x70] sm:$0xff]
          %v923 = vld [vmem:[%s907 + $0x78] sm:$0xff]
          %v924 = vmul.f32 %v235, %v908
          %v925 = vmul.f32 %v236, %v909
          %v926 = vmul.f32 %v237, %v910
          %v927 = vmul.f32 %v238, %v911
          %v928 = vmul.f32 %v239, %v912
          %v929 = vmul.f32 %v240, %v913
          %v930 = vmul.f32 %v241, %v914
          %v931 = vmul.f32 %v242, %v915
          %v932 = vmul.f32 %v243, %v916
          %v933 = vmul.f32 %v244, %v917
          %v934 = vmul.f32 %v245, %v918
          %v935 = vmul.f32 %v246, %v919
          %v936 = vmul.f32 %v247, %v920
          %v937 = vmul.f32 %v248, %v921
          %v938 = vmul.f32 %v249, %v922
          %v939 = vmul.f32 %v250, %v923
          %941 = vset.pattern.permute.xlu0 0
          %942 = vperm.xlu0 %941, %v924
          %v943 = vpop.permute.xlu0 %942
          %946 = vset.pattern.permute.xlu0 0
          %947 = vperm.xlu0 %946, %v925
          %v948 = vpop.permute.xlu0 %947
          %951 = vset.pattern.permute.xlu0 0
          %952 = vperm.xlu0 %951, %v926
          %v953 = vpop.permute.xlu0 %952
          %956 = vset.pattern.permute.xlu0 0
          %957 = vperm.xlu0 %956, %v927
          %v958 = vpop.permute.xlu0 %957
          %961 = vset.pattern.permute.xlu0 0
          %962 = vperm.xlu0 %961, %v928
          %v963 = vpop.permute.xlu0 %962
          %966 = vset.pattern.permute.xlu0 0
          %967 = vperm.xlu0 %966, %v929
          %v968 = vpop.permute.xlu0 %967
          %971 = vset.pattern.permute.xlu0 0
          %972 = vperm.xlu0 %971, %v930
          %v973 = vpop.permute.xlu0 %972
          %976 = vset.pattern.permute.xlu0 0
          %977 = vperm.xlu0 %976, %v931
          %v978 = vpop.permute.xlu0 %977
          %981 = vset.pattern.permute.xlu0 0
          %982 = vperm.xlu0 %981, %v932
          %v983 = vpop.permute.xlu0 %982
          %986 = vset.pattern.permute.xlu0 0
          %987 = vperm.xlu0 %986, %v933
          %v988 = vpop.permute.xlu0 %987
          %991 = vset.pattern.permute.xlu0 0
          %992 = vperm.xlu0 %991, %v934
          %v993 = vpop.permute.xlu0 %992
          %996 = vset.pattern.permute.xlu0 0
          %997 = vperm.xlu0 %996, %v935
          %v998 = vpop.permute.xlu0 %997
          %1001 = vset.pattern.permute.xlu0 0
          %1002 = vperm.xlu0 %1001, %v936
          %v1003 = vpop.permute.xlu0 %1002
          %1006 = vset.pattern.permute.xlu0 0
          %1007 = vperm.xlu0 %1006, %v937
          %v1008 = vpop.permute.xlu0 %1007
          %1011 = vset.pattern.permute.xlu0 0
          %1012 = vperm.xlu0 %1011, %v938
          %v1013 = vpop.permute.xlu0 %1012
          %1016 = vset.pattern.permute.xlu0 0
          %1017 = vperm.xlu0 %1016, %v939
          %v1018 = vpop.permute.xlu0 %1017
          %v1020 = vperm.slane %v255, 3
          %v1021 = vmul.f32 %v943, %v1020
          %v1022 = vmul.f32 %v948, %v1020
          %v1023 = vmul.f32 %v953, %v1020
          %v1024 = vmul.f32 %v958, %v1020
          %v1025 = vmul.f32 %v963, %v1020
          %v1026 = vmul.f32 %v968, %v1020
          %v1027 = vmul.f32 %v973, %v1020
          %v1028 = vmul.f32 %v978, %v1020
          %v1029 = vmul.f32 %v983, %v1020
          %v1030 = vmul.f32 %v988, %v1020
          %v1031 = vmul.f32 %v993, %v1020
          %v1032 = vmul.f32 %v998, %v1020
          %v1033 = vmul.f32 %v1003, %v1020
          %v1034 = vmul.f32 %v1008, %v1020
          %v1035 = vmul.f32 %v1013, %v1020
          %v1036 = vmul.f32 %v1018, %v1020
          %v1037 = vperm.slane %v271, 3
          %v1038 = vsub.f32 %v1021, %v1037
          %v1039 = vsub.f32 %v1022, %v1037
          %v1040 = vsub.f32 %v1023, %v1037
          %v1041 = vsub.f32 %v1024, %v1037
          %v1042 = vsub.f32 %v1025, %v1037
          %v1043 = vsub.f32 %v1026, %v1037
          %v1044 = vsub.f32 %v1027, %v1037
          %v1045 = vsub.f32 %v1028, %v1037
          %v1046 = vsub.f32 %v1029, %v1037
          %v1047 = vsub.f32 %v1030, %v1037
          %v1048 = vsub.f32 %v1031, %v1037
          %v1049 = vsub.f32 %v1032, %v1037
          %v1050 = vsub.f32 %v1033, %v1037
          %v1051 = vsub.f32 %v1034, %v1037
          %v1052 = vsub.f32 %v1035, %v1037
          %v1053 = vsub.f32 %v1036, %v1037
          %v1054 = vmul.f32 %v1038, 1.442695
          %v1055 = vpow.pop %v1054
          %v1056 = vmul.f32 %v1039, 1.442695
          %v1057 = vpow.pop %v1056
          %v1058 = vmul.f32 %v1040, 1.442695
          %v1059 = vpow.pop %v1058
          %v1060 = vmul.f32 %v1041, 1.442695
          %v1061 = vpow.pop %v1060
          %v1062 = vmul.f32 %v1042, 1.442695
          %v1063 = vpow.pop %v1062
          %v1064 = vmul.f32 %v1043, 1.442695
          %v1065 = vpow.pop %v1064
          %v1066 = vmul.f32 %v1044, 1.442695
          %v1067 = vpow.pop %v1066
          %v1068 = vmul.f32 %v1045, 1.442695
          %v1069 = vpow.pop %v1068
          %v1070 = vmul.f32 %v1046, 1.442695
          %v1071 = vpow.pop %v1070
          %v1072 = vmul.f32 %v1047, 1.442695
          %v1073 = vpow.pop %v1072
          %v1074 = vmul.f32 %v1048, 1.442695
          %v1075 = vpow.pop %v1074
          %v1076 = vmul.f32 %v1049, 1.442695
          %v1077 = vpow.pop %v1076
          %v1078 = vmul.f32 %v1050, 1.442695
          %v1079 = vpow.pop %v1078
          %v1080 = vmul.f32 %v1051, 1.442695
          %v1081 = vpow.pop %v1080
          %v1082 = vmul.f32 %v1052, 1.442695
          %v1083 = vpow.pop %v1082
          %v1084 = vmul.f32 %v1053, 1.442695
          %v1085 = vpow.pop %v1084
          %v1086 = vrot.slane %v261, 3
          %v1088 = vsel %vm453, %v1086, 1.0
          %1089 = vmatpush.msra.mxu0 %v1085
          %1090 = vmatpush.msra.mxu0 %v1083
          %1091 = vmatpush.msra.mxu0 %v1081
          %1092 = vmatpush.msra.mxu0 %v1079
          %1093 = vmatpush.msra.mxu0 %v1077
          %1094 = vmatpush.msra.mxu0 %v1075
          %1095 = vmatpush.msra.mxu0 %v1073
          %1096 = vmatpush.msra.mxu0 %v1071
          %1097 = vmatpush.msra.mxu0 %v1069
          %1098 = vmatpush.msra.mxu0 %v1067
          %1099 = vmatpush.msra.mxu0 %v1065
          %1100 = vmatpush.msra.mxu0 %v1063
          %1101 = vmatpush.msra.mxu0 %v1061
          %1102 = vmatpush.msra.mxu0 %v1059
          %1103 = vmatpush.msra.mxu0 %v1057
          %1104 = vmatpush.msra.mxu0 %v1055
          %1105 = vmatmul.f32.gmra.mxu0 %v1088
          %v1106 = vpop.f32.mrf.mxu0
          %v1107 = vadd.f32 0.0, %v1106
          %1108 = vdwg.mxu0
          %v1109 = vrot.slane %v475, 3
          %v1111 = vsub.f32 %v1107, %v1109
          %v1112 = vrcp.pop %v1107
          %v1114 = vrot.slane %v1112, 1
          %v1116 = vmul.f32 %v1111, %v1114
          %v1117 = vadd.f32 %v906, %v1116
          %s1118 = scalar_lea.vmem %s207, %s226 [#allocation2]
          %1119 = vst [vmem:[%s1118] sm:$0x1] %v1117
        $region41: #{tpu_custom_call.1} parent=35 // loop_footer
          %s230 = sadd.s32 1, %s226
        $region42: #{tpu_custom_call.1} parent=35 // loop_footer_branch
          %225 = sbr.rel target = $region38
        $region43: #{tpu_custom_call.1} parent=35 // loop_exit
          _
        %s1120 = sand.u32 %s120, 1
        %s1121 = scalar_lea.sflag [#allocation3], %s1120
        %s1122 = sand.u32 %s120, 1
        %s1123 = smul.addr %s1122, 8
        %s1124 = scalar_lea.vmem [#allocation2], %s1123
        // Predicated region
        $region44: #{tpu_custom_call.1} parent=35 // pred_check
          %p1125 = pneg %p130
        $region45: #{tpu_custom_call.1} parent=35 // pred_check_branch
          %1127 = sbr.rel (%p1125) target = $region47
        $region46: #{tpu_custom_call.1} parent=35 // pred_region
          %s1128 = smul.u32 8, %s18
          %1130 = vsyncadd %s1121, 0
          %s1131 = scalar_lea.hbm %s4, %s1128
          %s1132 = sshll.u32 %s1124, 4
          %s1133 = int_to_ptr.vmem [resolvable:$true] %s1132
          %s1134 = sshll.u32 %s1131, 4
          %s1135 = int_to_ptr.hbm [resolvable:$true] %s1134
          %1140 = dma.vmem_to_hbm [thread:$0]  %s1133, 128, %s1135, %s1121, 16, 16, 1
        $region47: #{tpu_custom_call.1} parent=35 // pred_fallthru
          _
      $region36: #{tpu_custom_call.1} parent=5 // pred_fallthru
        _
      %p1141 = scmp.le.s32.totalorder 2, %s13
      // Predicated region
      $region48: #{tpu_custom_call.1} parent=5 // pred_check
        %p1142 = pneg %p1141
      $region49: #{tpu_custom_call.1} parent=5 // pred_check_branch
        %1144 = sbr.rel (%p1142) target = $region51
      $region50: #{tpu_custom_call.1} parent=5 // pred_region
        %s1145 = ssub.s32 %s13, 2
        // Predicated region
        $region52: #{tpu_custom_call.1} parent=50 // pred_check
          %p1146 = pneg %p136
        $region53: #{tpu_custom_call.1} parent=50 // pred_check_branch
          %1148 = sbr.rel (%p1146) target = $region55
        $region54: #{tpu_custom_call.1} parent=50 // pred_region
          %s1149 = sand.u32 %s121, 1
          %s1150 = scalar_lea.sflag [#allocation3], %s1149
          %s1151 = sand.u32 %s121, 1
          %s1152 = smul.addr %s1151, 8
          %s1153 = scalar_lea.vmem [#allocation2], %s1152
          %1155 = dma.done %s1150, 128
        $region55: #{tpu_custom_call.1} parent=50 // pred_fallthru
          _
      $region51: #{tpu_custom_call.1} parent=5 // pred_fallthru
        _
    $region6: #{tpu_custom_call.1} parent=1 // loop_footer
      %s17 = sadd.s32 1, %s13
    $region7: #{tpu_custom_call.1} parent=1 // loop_footer_branch
      %12 = sbr.rel target = $region3
    $region8: #{tpu_custom_call.1} parent=1 // loop_exit
      _
    %1156 = vsyncpa [#allocation3], 1
    %s1157 = scalar_lea.sflag [#allocation3], 1
    %1158 = vsyncpa %s1157, 1

</llo_original>
